<compile_context>
chip_gen: v6e
topology: v6e:2x2x1
jax: 0.10.0
libtpu: 0.0.40
codegen_flags: <defaults>
</compile_context>

<pallas_src>
import functools
from math import exp, sqrt

import jax
import jax.numpy as jnp
from jax.experimental import pallas as pl
from jax.experimental.pallas import tpu as pltpu


def _softplus(x):
    # PyTorch nn.Softplus(beta=1, threshold=20): identity above the threshold.
    return jnp.where(x > 20.0, x, jnp.log1p(jnp.exp(jnp.minimum(x, 20.0))))


def _round8(n):
    return ((n + 7) // 8) * 8


# --------------------------------------------------------------------------------------
# One-time parameter prep (hoisted OUT of the per-forward hot path; cache the result).
# --------------------------------------------------------------------------------------
def prepare_params(params, num_nodes, log_sigma_min=None, log_sigma_max=None):
    w_enc = jnp.asarray(params["w_enc"], jnp.float32)
    b_enc = jnp.asarray(params["b_enc"], jnp.float32).reshape(1, -1)
    w1 = jnp.asarray(params["w1"], jnp.float32)
    b1 = jnp.asarray(params["b1"], jnp.float32).reshape(1, -1)
    w2 = jnp.asarray(params["w2"], jnp.float32)
    b2 = jnp.asarray(params["b2"], jnp.float32).reshape(1, -1)
    wmu = jnp.asarray(params["wmu"], jnp.float32)
    bmu = jnp.asarray(params["bmu"], jnp.float32).reshape(1, -1)
    wstd = jnp.asarray(params["wstd"], jnp.float32)
    bstd = jnp.asarray(params["bstd"], jnp.float32).reshape(1, -1)

    F, D = w_enc.shape
    N = num_nodes
    NF, ND = N * F, N * D
    H1, H2, A = w1.shape[1], w2.shape[1], wmu.shape[1]
    PW = max(128, ND)                       # lane width of every packed section
    assert D + 2 * A <= PW and H1 <= PW and H2 <= PW and ND <= PW

    blocks, layout = [], {}

    def add(name, mat, rows, col0=0):
        blk = jnp.zeros((rows, PW), jnp.float32)
        blk = blk.at[:mat.shape[0], col0:col0 + mat.shape[1]].set(mat)
        layout[name] = sum(b.shape[0] for b in blocks)   # 8-aligned row offset
        blocks.append(blk)

    # Synthetic encoder as a block-diagonal weight: a (B,N*F)@(N*F,N*D) matmul emits
    # node_embeds directly as a lane-dense slab (no in-kernel reshape).
    # TODO(synk): O(N^2) in size - fine for small N; switch to a node-tiled (B*N,F)@(F,D)
    # matmul if N grows beyond ~32.
    add("wenc", jnp.kron(jnp.eye(N, dtype=jnp.float32), w_enc), _round8(NF))
    add("benc", jnp.tile(b_enc, (1, N)), 8)
    # Graph mean readout folded into trunk layer 1:  obs @ W1 == ne @ (tile(W1,(N,1))/N)
    add("w1", jnp.tile(w1, (N, 1)) / N, PW)
    add("b1", b1, 8)
    # Explicit readout matrix for the `obs` output (obs lands in lanes [0, D)).
    add("r", jnp.kron(jnp.ones((N, 1), jnp.float32) / N,
                      jnp.eye(D, dtype=jnp.float32)), PW)
    add("w2", w2, PW)
    add("b2", b2, 8)
    # Fused [mu | sigma] head placed at lanes [D, D+2A) so it combines with the obs
    # lanes by a single lane-index select (no concat / relayout).
    add("wh", jnp.concatenate([wmu, wstd], axis=1), PW, col0=D)
    add("bh", jnp.concatenate([bmu, bstd], axis=1), 8, col0=D)

    p_slab = jnp.concatenate(blocks, axis=0)              # (rows, PW) single operand
    both = (log_sigma_min is not None) and (log_sigma_max is not None)
    meta = dict(num_nodes=N, feat_dim=F, obs_dim=D, action_dim=A, pw=PW, layout=layout,
                sigma_lo=(exp(log_sigma_min) if both else None),
                sigma_hi=(exp(log_sigma_max) if both else None))
    return p_slab, meta


# --------------------------------------------------------------------------------------
# Kernel
# --------------------------------------------------------------------------------------
def _two_stage_policy_kernel(x_ref, p_ref, out_ref, *, layout, nf, nd, pw,
                             obs_dim, action_dim, sigma_lo, sigma_hi):
    def blk(name, rows):
        o = layout[name]
        return p_ref[o:o + rows, :]        # static, 8-aligned ref slice (zero cost)

    x = x_ref[...]                         # (bb, N*F)

    # Synthetic encoder: per-node Linear+ReLU -> lane-dense node-embed slab.
    ne = jnp.maximum(
        jnp.dot(x, blk("wenc", nf), preferred_element_type=jnp.float32)
        + blk("benc", 1), 0.0)             # (bb, PW); lanes >= nd are exactly 0
    out_ref[:, 0:nd] = ne[:, 0:nd]         # lane-dense unmasked stores

    # net1 trunk (Linear+ReLU stack); layer 1 carries the fused mean-readout.
    h = jnp.maximum(jnp.dot(ne, blk("w1", pw), preferred_element_type=jnp.float32)
                    + blk("b1", 1), 0.0)
    h = jnp.maximum(jnp.dot(h, blk("w2", pw), preferred_element_type=jnp.float32)
                    + blk("b2", 1), 0.0)

    # Graph-level obs (lanes [0,D)) and fused [mu|sigma] head (lanes [D, D+2A)).
    obs_slab = jnp.dot(ne, blk("r", pw), preferred_element_type=jnp.float32)
    heads = jnp.dot(h, blk("wh", pw), preferred_element_type=jnp.float32) + blk("bh", 1)

    sig = _softplus(heads)
    if (sigma_lo is not None) and (sigma_hi is not None):   # clamp iff BOTH bounds set
        sig = jnp.clip(sig, sigma_lo, sigma_hi)
    lane = jax.lax.broadcasted_iota(jnp.int32, heads.shape, 1)
    packed = jnp.where(lane < obs_dim, obs_slab,
                       jnp.where(lane < obs_dim + action_dim, heads, sig))
    out_ref[:, nd:nd + pw] = packed        # single lane-dense store for obs|mu|sigma


# --------------------------------------------------------------------------------------
# Wrapper
# --------------------------------------------------------------------------------------
def two_stage_gauss_policy_forward(node_feats, p_slab, *, meta, batch_block=128):
    """Fused forward. Returns the packed (B, N*D + PW) output slab:
         lanes [0, N*D)                node_embeds
         lanes [N*D, N*D+D)            obs (graph-level embedding)
         lanes [N*D+D, N*D+D+A)        mu
         lanes [N*D+D+A, N*D+D+2A)     sigma
       Use `unpack_outputs` (one fused split) on the result."""
    B, N, F = node_feats.shape
    assert N == meta["num_nodes"] and F == meta["feat_dim"]
    D, A, PW = meta["obs_dim"], meta["action_dim"], meta["pw"]
    NF, ND = N * F, N * D
    out_w = ND + PW

    x = node_feats.reshape(B, NF).astype(jnp.float32)
    kernel = functools.partial(
        _two_stage_policy_kernel, layout=meta["layout"], nf=NF, nd=ND, pw=PW,
        obs_dim=D, action_dim=A, sigma_lo=meta["sigma_lo"], sigma_hi=meta["sigma_hi"])

    p_rows = p_slab.shape[0]

    def cost(rows):
        return pl.CostEstimate(
            flops=2 * rows * (NF * PW + 4 * PW * PW),
            transcendentals=2 * rows * PW,
            bytes_accessed=4 * (rows * NF + p_rows * PW + rows * out_w))

    if B <= batch_block:
        # Single invocation; whole arrays resident in VMEM (no grid, no double-buffering).
        return pl.pallas_call(
            kernel,
            in_specs=[pl.BlockSpec(memory_space=pltpu.MemorySpace.VMEM)] * 2,
            out_specs=pl.BlockSpec(memory_space=pltpu.MemorySpace.VMEM),
            out_shape=jax.ShapeDtypeStruct((B, out_w), jnp.float32),
            cost_estimate=cost(B),
        )(x, p_slab)

    # Large batches: tile the batch with a parallel grid axis (both TensorCores on v7x;
    # pipelined batch tiles on v5e/v6e).  Params stay resident (same block every step).
    bb = batch_block
    assert bb % 8 == 0
    Bp = pl.cdiv(B, bb) * bb
    if Bp != B:
        x = jnp.pad(x, ((0, Bp - B), (0, 0)))
    out = pl.pallas_call(
        kernel,
        grid=(Bp // bb,),
        in_specs=[pl.BlockSpec((bb, NF), lambda i: (i, 0)),
                  pl.BlockSpec(p_slab.shape, lambda i: (0, 0))],
        out_specs=pl.BlockSpec((bb, out_w), lambda i: (i, 0)),
        out_shape=jax.ShapeDtypeStruct((Bp, out_w), jnp.float32),
        compiler_params=pltpu.CompilerParams(dimension_semantics=("parallel",)),
        cost_estimate=cost(Bp),
    )(x, p_slab)
    return out[:B] if Bp != B else out


def unpack_outputs(packed, meta):
    N, D, A = meta["num_nodes"], meta["obs_dim"], meta["action_dim"]
    ND = N * D
    B = packed.shape[0]
    node_embeds = packed[:, :ND].reshape(B, N, D)
    obs = packed[:, ND:ND + D]
    mus = packed[:, ND + D:ND + D + A]
    sigmas = packed[:, ND + D + A:ND + D + 2 * A]
    return mus, sigmas, obs, node_embeds


# --------------------------------------------------------------------------------------
# Pure-JAX reference + test harness
# --------------------------------------------------------------------------------------
def _init_linear(key, in_dim, out_dim):
    # PyTorch nn.Linear default init: U(-1/sqrt(in), 1/sqrt(in)) for W and b.
    kw, kb = jax.random.split(key)
    bound = 1.0 / sqrt(in_dim)
    w = jax.random.uniform(kw, (in_dim, out_dim), jnp.float32, -bound, bound)
    b = jax.random.uniform(kb, (1, out_dim), jnp.float32, -bound, bound)
    return w, b


def _reference(node_feats, params, sigma_lo=None, sigma_hi=None):
    ne = jax.nn.relu(jnp.einsum("bnf,fd->bnd", node_feats, params["w_enc"])
                     + params["b_enc"])
    obs = ne.mean(axis=1)
    h = jax.nn.relu(obs @ params["w1"] + params["b1"])
    h = jax.nn.relu(h @ params["w2"] + params["b2"])
    mu = h @ params["wmu"] + params["bmu"]
    s = _softplus(h @ params["wstd"] + params["bstd"])
    if sigma_lo is not None and sigma_hi is not None:
        s = jnp.clip(s, sigma_lo, sigma_hi)
    return mu, s, obs, ne


if __name__ == "__main__":
    # Small shapes consistent with the module.
    B, N, F = 4, 8, 8          # 4 graphs, 8 nodes each, 8 raw node features
    obs_dim = 16               # N * obs_dim = 128 -> lane-dense node-embed slab
    action_dim = 4
    hiddens1 = (32, 32)
    log_sigma_min, log_sigma_max = -5.0, 2.0
    sigma_lo, sigma_hi = exp(log_sigma_min), exp(log_sigma_max)

    root = jax.random.PRNGKey(0)
    k_x, k_enc, k_1, k_2, k_mu, k_std, k_x2 = jax.random.split(root, 7)

    node_feats = jax.random.normal(k_x, (B, N, F), jnp.float32)
    w_enc, b_enc = _init_linear(k_enc, F, obs_dim)
    w1, b1 = _init_linear(k_1, obs_dim, hiddens1[0])
    w2, b2 = _init_linear(k_2, hiddens1[0], hiddens1[1])
    wmu, bmu = _init_linear(k_mu, hiddens1[1], action_dim)
    wstd, bstd = _init_linear(k_std, hiddens1[1], action_dim)
    params = dict(w_enc=w_enc, b_enc=b_enc, w1=w1, b1=b1, w2=w2, b2=b2,
                  wmu=wmu, bmu=bmu, wstd=wstd, bstd=bstd)

    # One-time parameter prep (cached; NOT rebuilt per forward).
    p_slab, meta = prepare_params(params, num_nodes=N,
                                  log_sigma_min=log_sigma_min,
                                  log_sigma_max=log_sigma_max)
    fwd = jax.jit(functools.partial(two_stage_gauss_policy_forward, meta=meta))

    tol = dict(atol=2e-3, rtol=2e-3)

    # ---- small batch: gridless single-VMEM-block path ----
    packed = jax.block_until_ready(fwd(node_feats, p_slab))
    mus, sigmas, obs, node_embeds = unpack_outputs(packed, meta)
    mu_r, s_r, obs_r, ne_r = _reference(node_feats, params, sigma_lo, sigma_hi)
    assert jnp.allclose(mus, mu_r, **tol), "mu mismatch"
    assert jnp.allclose(sigmas, s_r, **tol), "sigma mismatch"
    assert jnp.allclose(obs, obs_r, **tol), "obs mismatch"
    assert jnp.allclose(node_embeds, ne_r, **tol), "node_embeds mismatch"
    assert bool(jnp.all(sigmas > 0.0)), "softplus must give positive sigmas"
    assert bool(jnp.all((sigmas >= sigma_lo - 1e-6) & (sigmas <= sigma_hi + 1e-6))), \
        "sigma clamp violated"

    # ---- large batch: gridded, parallel batch axis (exercises padding + 2 tiles) ----
    B2 = 160
    node_feats2 = jax.random.normal(k_x2, (B2, N, F), jnp.float32)
    packed2 = jax.block_until_ready(fwd(node_feats2, p_slab))
    mus2, sigmas2, obs2, ne2 = unpack_outputs(packed2, meta)
    mu2_r, s2_r, obs2_r, ne2_r = _reference(node_feats2, params, sigma_lo, sigma_hi)
    assert jnp.allclose(mus2, mu2_r, **tol), "mu mismatch (gridded)"
    assert jnp.allclose(sigmas2, s2_r, **tol), "sigma mismatch (gridded)"
    assert jnp.allclose(obs2, obs2_r, **tol), "obs mismatch (gridded)"
    assert jnp.allclose(ne2, ne2_r, **tol), "node_embeds mismatch (gridded)"

    print("KERNEL_OK")
</pallas_src>

<mosaic_0001>
module attributes {stable_mosaic.version = 11 : i64} {
  func.func @_two_stage_policy_kernel(%arg0: memref<4x64xf32, #tpu.memory_space<vmem>>, %arg1: memref<608x128xf32, #tpu.memory_space<vmem>>, %arg2: memref<4x256xf32, #tpu.memory_space<vmem>>) attributes {dimension_semantics = [], scalar_prefetch = 0 : i64, scratch_operands = 0 : i64, tpu.core_type = #tpu.core_type<tc>} {
    %c0 = arith.constant 0 : index
    %c0_0 = arith.constant 0 : index
    %0 = vector.load %arg0[%c0, %c0_0] : memref<4x64xf32, #tpu.memory_space<vmem>>, vector<4x64xf32>
    %c0_1 = arith.constant 0 : index
    %c0_2 = arith.constant 0 : index
    %1 = vector.load %arg1[%c0_1, %c0_2] : memref<608x128xf32, #tpu.memory_space<vmem>>, vector<64x128xf32>
    %cst = arith.constant dense<0.000000e+00> : vector<4x128xf32>
    %2 = tpu.matmul %0, %1, %cst {dimension_numbers = #tpu.dot_dimension_numbers<[1], [0], [0], [1], [0, 0, 1, 1], [], []>} : vector<4x64xf32>, vector<64x128xf32>, vector<4x128xf32> -> vector<4x128xf32>
    %c64 = arith.constant 64 : index
    %c0_3 = arith.constant 0 : index
    %3 = vector.load %arg1[%c64, %c0_3] : memref<608x128xf32, #tpu.memory_space<vmem>>, vector<1x128xf32>
    %4 = vector.broadcast %3 : vector<1x128xf32> to vector<4x128xf32>
    %5 = arith.addf %2, %4 : vector<4x128xf32>
    %cst_4 = arith.constant 0.000000e+00 : f32
    %6 = vector.broadcast %cst_4 : f32 to vector<4x128xf32>
    %7 = arith.maximumf %5, %6 : vector<4x128xf32>
    %c0_5 = arith.constant 0 : index
    %c0_6 = arith.constant 0 : index
    %8 = vector.load %arg2[%c0_5, %c0_6] : memref<4x256xf32, #tpu.memory_space<vmem>>, vector<4x128xf32>
    tpu.vector_store %arg2[%c0_5, %c0_6], %7 {strides = array<i32>} : memref<4x256xf32, #tpu.memory_space<vmem>>, vector<4x128xf32>,
    %c72 = arith.constant 72 : index
    %c0_7 = arith.constant 0 : index
    %9 = vector.load %arg1[%c72, %c0_7] : memref<608x128xf32, #tpu.memory_space<vmem>>, vector<128x128xf32>
    %cst_8 = arith.constant dense<0.000000e+00> : vector<4x128xf32>
    %10 = tpu.matmul %7, %9, %cst_8 {dimension_numbers = #tpu.dot_dimension_numbers<[1], [0], [0], [1], [0, 0, 1, 1], [], []>} : vector<4x128xf32>, vector<128x128xf32>, vector<4x128xf32> -> vector<4x128xf32>
    %c200 = arith.constant 200 : index
    %c0_9 = arith.constant 0 : index
    %11 = vector.load %arg1[%c200, %c0_9] : memref<608x128xf32, #tpu.memory_space<vmem>>, vector<1x128xf32>
    %12 = vector.broadcast %11 : vector<1x128xf32> to vector<4x128xf32>
    %13 = arith.addf %10, %12 : vector<4x128xf32>
    %cst_10 = arith.constant 0.000000e+00 : f32
    %14 = vector.broadcast %cst_10 : f32 to vector<4x128xf32>
    %15 = arith.maximumf %13, %14 : vector<4x128xf32>
    %c336 = arith.constant 336 : index
    %c0_11 = arith.constant 0 : index
    %16 = vector.load %arg1[%c336, %c0_11] : memref<608x128xf32, #tpu.memory_space<vmem>>, vector<128x128xf32>
    %cst_12 = arith.constant dense<0.000000e+00> : vector<4x128xf32>
    %17 = tpu.matmul %15, %16, %cst_12 {dimension_numbers = #tpu.dot_dimension_numbers<[1], [0], [0], [1], [0, 0, 1, 1], [], []>} : vector<4x128xf32>, vector<128x128xf32>, vector<4x128xf32> -> vector<4x128xf32>
    %c464 = arith.constant 464 : index
    %c0_13 = arith.constant 0 : index
    %18 = vector.load %arg1[%c464, %c0_13] : memref<608x128xf32, #tpu.memory_space<vmem>>, vector<1x128xf32>
    %19 = vector.broadcast %18 : vector<1x128xf32> to vector<4x128xf32>
    %20 = arith.addf %17, %19 : vector<4x128xf32>
    %cst_14 = arith.constant 0.000000e+00 : f32
    %21 = vector.broadcast %cst_14 : f32 to vector<4x128xf32>
    %22 = arith.maximumf %20, %21 : vector<4x128xf32>
    %c208 = arith.constant 208 : index
    %c0_15 = arith.constant 0 : index
    %23 = vector.load %arg1[%c208, %c0_15] : memref<608x128xf32, #tpu.memory_space<vmem>>, vector<128x128xf32>
    %cst_16 = arith.constant dense<0.000000e+00> : vector<4x128xf32>
    %24 = tpu.matmul %7, %23, %cst_16 {dimension_numbers = #tpu.dot_dimension_numbers<[1], [0], [0], [1], [0, 0, 1, 1], [], []>} : vector<4x128xf32>, vector<128x128xf32>, vector<4x128xf32> -> vector<4x128xf32>
    %c472 = arith.constant 472 : index
    %c0_17 = arith.constant 0 : index
    %25 = vector.load %arg1[%c472, %c0_17] : memref<608x128xf32, #tpu.memory_space<vmem>>, vector<128x128xf32>
    %cst_18 = arith.constant dense<0.000000e+00> : vector<4x128xf32>
    %26 = tpu.matmul %22, %25, %cst_18 {dimension_numbers = #tpu.dot_dimension_numbers<[1], [0], [0], [1], [0, 0, 1, 1], [], []>} : vector<4x128xf32>, vector<128x128xf32>, vector<4x128xf32> -> vector<4x128xf32>
    %c600 = arith.constant 600 : index
    %c0_19 = arith.constant 0 : index
    %27 = vector.load %arg1[%c600, %c0_19] : memref<608x128xf32, #tpu.memory_space<vmem>>, vector<1x128xf32>
    %28 = vector.broadcast %27 : vector<1x128xf32> to vector<4x128xf32>
    %29 = arith.addf %26, %28 : vector<4x128xf32>
    %cst_20 = arith.constant 2.000000e+01 : f32
    %30 = vector.broadcast %cst_20 : f32 to vector<4x128xf32>
    %31 = arith.cmpf ogt, %29, %30 : vector<4x128xf32>
    %cst_21 = arith.constant 2.000000e+01 : f32
    %32 = vector.broadcast %cst_21 : f32 to vector<4x128xf32>
    %33 = arith.minimumf %29, %32 : vector<4x128xf32>
    %34 = math.exp %33 : vector<4x128xf32>
    %35 = math.log1p %34 : vector<4x128xf32>
    %36 = arith.select %31, %29, %35 : vector<4x128xi1>, vector<4x128xf32>
    %cst_22 = arith.constant 0.006737947 : f32
    %cst_23 = arith.constant 7.3890562 : f32
    %37 = vector.broadcast %cst_22 : f32 to vector<4x128xf32>
    %38 = arith.maximumf %37, %36 : vector<4x128xf32>
    %39 = vector.broadcast %cst_23 : f32 to vector<4x128xf32>
    %40 = arith.minimumf %39, %38 : vector<4x128xf32>
    %41 = tpu.iota {dimensions = array<i32: 1>} : vector<4x128xi32>
    %c16_i32 = arith.constant 16 : i32
    %42 = vector.broadcast %c16_i32 : i32 to vector<4x128xi32>
    %43 = arith.cmpi slt, %41, %42 : vector<4x128xi32>
    %c20_i32 = arith.constant 20 : i32
    %44 = vector.broadcast %c20_i32 : i32 to vector<4x128xi32>
    %45 = arith.cmpi slt, %41, %44 : vector<4x128xi32>
    %46 = arith.select %45, %29, %40 : vector<4x128xi1>, vector<4x128xf32>
    %47 = arith.select %43, %24, %46 : vector<4x128xi1>, vector<4x128xf32>
    %c0_24 = arith.constant 0 : index
    %c128 = arith.constant 128 : index
    %48 = vector.load %arg2[%c0_24, %c128] : memref<4x256xf32, #tpu.memory_space<vmem>>, vector<4x128xf32>
    tpu.vector_store %arg2[%c0_24, %c128], %47 {strides = array<i32>} : memref<4x256xf32, #tpu.memory_space<vmem>>, vector<4x128xf32>,
    return
  }
}

</mosaic_0001>

<llo_original>
// kernel: two_stage_gauss_policy_forward.1
$region0: #{two_stage_gauss_policy_forward.1}
  #allocation0 [shape = 'u32[]', space=smem, size = 0x4, offset = 0x4, fixed_abs, tag = 'smem constant byte address 0x4 - core index']
  #allocation1 [shape = 'u32[144,128]{1,0:T(1,128)}', space=vmem, size = 0x12000, scoped, tag = 'internal scratch']
  %s0 = inlined_call_operand.vmem [shape: f32[4,64], index: 0, kind: input, shape index: {}]
  %s1 = inlined_call_operand.hbm [shape: f32[608,128], index: 1, kind: input, shape index: {}]
  %s2 = inlined_call_operand.hbm [shape: f32[4,256], index: 2, kind: output, shape index: {}]
  %s3 = sld [smem:[#allocation0]]
  $region22: #{two_stage_gauss_policy_forward.1} parent=0
    _
  %s5 = ssub.s32 1, %s3
  %s6 = scalar_select 0, %s5, %s3
  $region1: #{two_stage_gauss_policy_forward.1} parent=0
    #allocation2 [shape = 'u8[311296]{0}', space=vmem, size = 0x4c000, scoped, tag = 'input window, operand 1, single buffered']
    #allocation3 [shape = 's32[1]{0}', space=sflag, size = 0x4, scoped, tag = 'scoped memory for two_stage_gauss_policy_forward.1']
    #allocation4 [shape = 's32[1]{0}', space=sflag, size = 0x4, scoped, tag = 'scoped memory for two_stage_gauss_policy_forward.1']
    #allocation5 [shape = 'u8[4096]{0}', space=vmem, size = 0x1000, scoped, tag = 'output window, operand 0, single buffered']
    %7 = vsyncpa [#allocation3], 0
    %8 = vsyncpa [#allocation4], 0
    // Predicated region
    $region2: #{two_stage_gauss_policy_forward.1} parent=1 // pred_check
      _
    $region3: #{two_stage_gauss_policy_forward.1} parent=1 // pred_check_branch
      %10 = sbr.rel (0) target = $region5
    $region4: #{two_stage_gauss_policy_forward.1} parent=1 // pred_region
      _
    $region5: #{two_stage_gauss_policy_forward.1} parent=1 // pred_fallthru
      _
    // Predicated region
    $region6: #{two_stage_gauss_policy_forward.1} parent=1 // pred_check
      _
    $region7: #{two_stage_gauss_policy_forward.1} parent=1 // pred_check_branch
      %12 = sbr.rel (0) target = $region9
    $region8: #{two_stage_gauss_policy_forward.1} parent=1 // pred_region
      %s14 = ssub.s32 9728, 9728
      %15 = vsyncadd [#allocation3], %s14
      %s16 = sshll.u32 [#allocation2], 4
      %s17 = int_to_ptr.vmem [resolvable:$true] %s16
      %22 = dma.hbm_to_vmem [thread:$0]  %s1, 9728, %s17, [#allocation3], 128, 128, 8
    $region9: #{two_stage_gauss_policy_forward.1} parent=1 // pred_fallthru
      _
    // Predicated region
    $region10: #{two_stage_gauss_policy_forward.1} parent=1 // pred_check
      _
    $region11: #{two_stage_gauss_policy_forward.1} parent=1 // pred_check_branch
      %24 = sbr.rel (0) target = $region13
    $region12: #{two_stage_gauss_policy_forward.1} parent=1 // pred_region
      %25 = dma.done [#allocation3], 9728
    $region13: #{two_stage_gauss_policy_forward.1} parent=1 // pred_fallthru
      _
    %v26 = vld [vmem:[%s0] sm:$0xf]
    %v27 = vld [vmem:[#allocation2] sm:$0xff]
    %v28 = vld [vmem:[#allocation2 + $0x8] sm:$0xff]
    %v29 = vld [vmem:[#allocation2 + $0x10] sm:$0xff]
    %v30 = vld [vmem:[#allocation2 + $0x18] sm:$0xff]
    %v31 = vld [vmem:[#allocation2 + $0x20] sm:$0xff]
    %v32 = vld [vmem:[#allocation2 + $0x28] sm:$0xff]
    %v33 = vld [vmem:[#allocation2 + $0x30] sm:$0xff]
    %v34 = vld [vmem:[#allocation2 + $0x38] sm:$0xff]
    %v35 = vld [vmem:[#allocation2 + $0x40] sm:$0x1]
    %v36 = vlaneseq
    %v37 = vshrl.u32 %v36, 7
    %v38 = vsub.s32 0, %v37
    %v39 = vrot.slane %v35, %v38
    %vm40 = vcmask 523264
    %v42 = vsel %vm40, %v26, 0
    %44 = vmatprep.subr.mxu0 0.0
    %45 = vmatpush1.msra.mxu0 0.0
    %46 = vmatprep.subr.mxu0 0.0
    %47 = vmatpush1.msra.mxu0 0.0
    %48 = vmatprep.subr.mxu0 0.0
    %49 = vmatpush1.msra.mxu0 0.0
    %50 = vmatprep.subr.mxu0 0.0
    %51 = vmatpush1.msra.mxu0 0.0
    %52 = vmatprep.subr.mxu0 0.0
    %53 = vmatpush1.msra.mxu0 0.0
    %54 = vmatprep.subr.mxu0 0.0
    %55 = vmatpush1.msra.mxu0 0.0
    %56 = vmatprep.subr.mxu0 0.0
    %57 = vmatpush1.msra.mxu0 0.0
    %58 = vmatprep.subr.mxu0 0.0
    %59 = vmatpush1.msra.mxu0 0.0
    %60 = vmatprep.subr.mxu0 0.0
    %61 = vmatpush1.msra.mxu0 %v34
    %62 = vmatprep.subr.mxu0 0.0
    %63 = vmatpush1.msra.mxu0 %v33
    %64 = vmatprep.subr.mxu0 0.0
    %65 = vmatpush1.msra.mxu0 %v32
    %66 = vmatprep.subr.mxu0 0.0
    %67 = vmatpush1.msra.mxu0 %v31
    %68 = vmatprep.subr.mxu0 0.0
    %69 = vmatpush1.msra.mxu0 %v30
    %70 = vmatprep.subr.mxu0 0.0
    %71 = vmatpush1.msra.mxu0 %v29
    %72 = vmatprep.subr.mxu0 0.0
    %73 = vmatpush1.msra.mxu0 %v28
    %74 = vmatprep.subr.mxu0 0.0
    %75 = vmatpush1.msra.mxu0 %v27
    %76 = vmatprep.subr.mxu0 0.0
    %77 = vmatpush2.msra.mxu0 0.0
    %78 = vmatprep.subr.mxu0 0.0
    %79 = vmatpush2.msra.mxu0 0.0
    %80 = vmatprep.subr.mxu0 0.0
    %81 = vmatpush2.msra.mxu0 0.0
    %82 = vmatprep.subr.mxu0 0.0
    %83 = vmatpush2.msra.mxu0 0.0
    %84 = vmatprep.subr.mxu0 0.0
    %85 = vmatpush2.msra.mxu0 0.0
    %86 = vmatprep.subr.mxu0 0.0
    %87 = vmatpush2.msra.mxu0 0.0
    %88 = vmatprep.subr.mxu0 0.0
    %89 = vmatpush2.msra.mxu0 0.0
    %90 = vmatprep.subr.mxu0 0.0
    %91 = vmatpush2.msra.mxu0 0.0
    %92 = vmatprep.subr.mxu0 0.0
    %93 = vmatpush2.msra.mxu0 0.0
    %94 = vmatprep.subr.mxu0 0.0
    %95 = vmatpush2.msra.mxu0 0.0
    %96 = vmatprep.subr.mxu0 0.0
    %97 = vmatpush2.msra.mxu0 0.0
    %98 = vmatprep.subr.mxu0 0.0
    %99 = vmatpush2.msra.mxu0 0.0
    %100 = vmatprep.subr.mxu0 0.0
    %101 = vmatpush2.msra.mxu0 0.0
    %102 = vmatprep.subr.mxu0 0.0
    %103 = vmatpush2.msra.mxu0 0.0
    %104 = vmatprep.subr.mxu0 0.0
    %105 = vmatpush2.msra.mxu0 0.0
    %106 = vmatprep.subr.mxu0 0.0
    %107 = vmatpush2.msra.mxu0 0.0
    %108 = vmatprep.mubr.f32.mxu0 0.0
    %109 = vmatmul.mubr.f32.gmra.mxu0 %v42
    %v110 = vpop.f32.mrf.mxu0
    %v111 = vadd.f32 %v39, %v110
    %v112 = vpop.f32.mrf.mxu0
    %113 = vdwg.mxu0
    %v114 = vmax.f32 %v111, 0.0
    %115 = vst [vmem:[#allocation5] sm:$0xf] %v114
    %v116 = vld [vmem:[#allocation2 + $0x48] sm:$0xff]
    %v117 = vld [vmem:[#allocation2 + $0x50] sm:$0xff]
    %v118 = vld [vmem:[#allocation2 + $0x58] sm:$0xff]
    %v119 = vld [vmem:[#allocation2 + $0x60] sm:$0xff]
    %v120 = vld [vmem:[#allocation2 + $0x68] sm:$0xff]
    %v121 = vld [vmem:[#allocation2 + $0x70] sm:$0xff]
    %v122 = vld [vmem:[#allocation2 + $0x78] sm:$0xff]
    %v123 = vld [vmem:[#allocation2 + $0x80] sm:$0xff]
    %v124 = vld [vmem:[#allocation2 + $0x88] sm:$0xff]
    %v125 = vld [vmem:[#allocation2 + $0x90] sm:$0xff]
    %v126 = vld [vmem:[#allocation2 + $0x98] sm:$0xff]
    %v127 = vld [vmem:[#allocation2 + $0xa0] sm:$0xff]
    %v128 = vld [vmem:[#allocation2 + $0xa8] sm:$0xff]
    %v129 = vld [vmem:[#allocation2 + $0xb0] sm:$0xff]
    %v130 = vld [vmem:[#allocation2 + $0xb8] sm:$0xff]
    %v131 = vld [vmem:[#allocation2 + $0xc0] sm:$0xff]
    %v132 = vld [vmem:[#allocation2 + $0xc8] sm:$0x1]
    %v133 = vlaneseq
    %v134 = vshrl.u32 %v133, 7
    %v135 = vsub.s32 0, %v134
    %v136 = vrot.slane %v132, %v135
    %137 = vmatprep.subr.mxu0 0.0
    %138 = vmatpush1.msra.mxu0 %v131
    %139 = vmatprep.subr.mxu0 0.0
    %140 = vmatpush1.msra.mxu0 %v130
    %141 = vmatprep.subr.mxu0 0.0
    %142 = vmatpush1.msra.mxu0 %v129
    %143 = vmatprep.subr.mxu0 0.0
    %144 = vmatpush1.msra.mxu0 %v128
    %145 = vmatprep.subr.mxu0 0.0
    %146 = vmatpush1.msra.mxu0 %v127
    %147 = vmatprep.subr.mxu0 0.0
    %148 = vmatpush1.msra.mxu0 %v126
    %149 = vmatprep.subr.mxu0 0.0
    %150 = vmatpush1.msra.mxu0 %v125
    %151 = vmatprep.subr.mxu0 0.0
    %152 = vmatpush1.msra.mxu0 %v124
    %153 = vmatprep.subr.mxu0 0.0
    %154 = vmatpush1.msra.mxu0 %v123
    %155 = vmatprep.subr.mxu0 0.0
    %156 = vmatpush1.msra.mxu0 %v122
    %157 = vmatprep.subr.mxu0 0.0
    %158 = vmatpush1.msra.mxu0 %v121
    %159 = vmatprep.subr.mxu0 0.0
    %160 = vmatpush1.msra.mxu0 %v120
    %161 = vmatprep.subr.mxu0 0.0
    %162 = vmatpush1.msra.mxu0 %v119
    %163 = vmatprep.subr.mxu0 0.0
    %164 = vmatpush1.msra.mxu0 %v118
    %165 = vmatprep.subr.mxu0 0.0
    %166 = vmatpush1.msra.mxu0 %v117
    %167 = vmatprep.subr.mxu0 0.0
    %168 = vmatpush1.msra.mxu0 %v116
    %169 = vmatprep.subr.mxu0 0.0
    %170 = vmatpush2.msra.mxu0 0.0
    %171 = vmatprep.subr.mxu0 0.0
    %172 = vmatpush2.msra.mxu0 0.0
    %173 = vmatprep.subr.mxu0 0.0
    %174 = vmatpush2.msra.mxu0 0.0
    %175 = vmatprep.subr.mxu0 0.0
    %176 = vmatpush2.msra.mxu0 0.0
    %177 = vmatprep.subr.mxu0 0.0
    %178 = vmatpush2.msra.mxu0 0.0
    %179 = vmatprep.subr.mxu0 0.0
    %180 = vmatpush2.msra.mxu0 0.0
    %181 = vmatprep.subr.mxu0 0.0
    %182 = vmatpush2.msra.mxu0 0.0
    %183 = vmatprep.subr.mxu0 0.0
    %184 = vmatpush2.msra.mxu0 0.0
    %185 = vmatprep.subr.mxu0 0.0
    %186 = vmatpush2.msra.mxu0 0.0
    %187 = vmatprep.subr.mxu0 0.0
    %188 = vmatpush2.msra.mxu0 0.0
    %189 = vmatprep.subr.mxu0 0.0
    %190 = vmatpush2.msra.mxu0 0.0
    %191 = vmatprep.subr.mxu0 0.0
    %192 = vmatpush2.msra.mxu0 0.0
    %193 = vmatprep.subr.mxu0 0.0
    %194 = vmatpush2.msra.mxu0 0.0
    %195 = vmatprep.subr.mxu0 0.0
    %196 = vmatpush2.msra.mxu0 0.0
    %197 = vmatprep.subr.mxu0 0.0
    %198 = vmatpush2.msra.mxu0 0.0
    %199 = vmatprep.subr.mxu0 0.0
    %200 = vmatpush2.msra.mxu0 0.0
    %201 = vmatprep.mubr.f32.mxu0 0.0
    %202 = vmatmul.mubr.f32.gmra.mxu0 %v114
    %v203 = vpop.f32.mrf.mxu0
    %v204 = vadd.f32 %v136, %v203
    %v205 = vpop.f32.mrf.mxu0
    %206 = vdwg.mxu0
    %v207 = vmax.f32 %v204, 0.0
    %v208 = vld [vmem:[#allocation2 + $0x150] sm:$0xff]
    %v209 = vld [vmem:[#allocation2 + $0x158] sm:$0xff]
    %v210 = vld [vmem:[#allocation2 + $0x160] sm:$0xff]
    %v211 = vld [vmem:[#allocation2 + $0x168] sm:$0xff]
    %v212 = vld [vmem:[#allocation2 + $0x170] sm:$0xff]
    %v213 = vld [vmem:[#allocation2 + $0x178] sm:$0xff]
    %v214 = vld [vmem:[#allocation2 + $0x180] sm:$0xff]
    %v215 = vld [vmem:[#allocation2 + $0x188] sm:$0xff]
    %v216 = vld [vmem:[#allocation2 + $0x190] sm:$0xff]
    %v217 = vld [vmem:[#allocation2 + $0x198] sm:$0xff]
    %v218 = vld [vmem:[#allocation2 + $0x1a0] sm:$0xff]
    %v219 = vld [vmem:[#allocation2 + $0x1a8] sm:$0xff]
    %v220 = vld [vmem:[#allocation2 + $0x1b0] sm:$0xff]
    %v221 = vld [vmem:[#allocation2 + $0x1b8] sm:$0xff]
    %v222 = vld [vmem:[#allocation2 + $0x1c0] sm:$0xff]
    %v223 = vld [vmem:[#allocation2 + $0x1c8] sm:$0xff]
    %v224 = vld [vmem:[#allocation2 + $0x1d0] sm:$0x1]
    %v225 = vlaneseq
    %v226 = vshrl.u32 %v225, 7
    %v227 = vsub.s32 0, %v226
    %v228 = vrot.slane %v224, %v227
    %229 = vmatprep.subr.mxu0 0.0
    %230 = vmatpush1.msra.mxu0 %v223
    %231 = vmatprep.subr.mxu0 0.0
    %232 = vmatpush1.msra.mxu0 %v222
    %233 = vmatprep.subr.mxu0 0.0
    %234 = vmatpush1.msra.mxu0 %v221
    %235 = vmatprep.subr.mxu0 0.0
    %236 = vmatpush1.msra.mxu0 %v220
    %237 = vmatprep.subr.mxu0 0.0
    %238 = vmatpush1.msra.mxu0 %v219
    %239 = vmatprep.subr.mxu0 0.0
    %240 = vmatpush1.msra.mxu0 %v218
    %241 = vmatprep.subr.mxu0 0.0
    %242 = vmatpush1.msra.mxu0 %v217
    %243 = vmatprep.subr.mxu0 0.0
    %244 = vmatpush1.msra.mxu0 %v216
    %245 = vmatprep.subr.mxu0 0.0
    %246 = vmatpush1.msra.mxu0 %v215
    %247 = vmatprep.subr.mxu0 0.0
    %248 = vmatpush1.msra.mxu0 %v214
    %249 = vmatprep.subr.mxu0 0.0
    %250 = vmatpush1.msra.mxu0 %v213
    %251 = vmatprep.subr.mxu0 0.0
    %252 = vmatpush1.msra.mxu0 %v212
    %253 = vmatprep.subr.mxu0 0.0
    %254 = vmatpush1.msra.mxu0 %v211
    %255 = vmatprep.subr.mxu0 0.0
    %256 = vmatpush1.msra.mxu0 %v210
    %257 = vmatprep.subr.mxu0 0.0
    %258 = vmatpush1.msra.mxu0 %v209
    %259 = vmatprep.subr.mxu0 0.0
    %260 = vmatpush1.msra.mxu0 %v208
    %261 = vmatprep.subr.mxu0 0.0
    %262 = vmatpush2.msra.mxu0 0.0
    %263 = vmatprep.subr.mxu0 0.0
    %264 = vmatpush2.msra.mxu0 0.0
    %265 = vmatprep.subr.mxu0 0.0
    %266 = vmatpush2.msra.mxu0 0.0
    %267 = vmatprep.subr.mxu0 0.0
    %268 = vmatpush2.msra.mxu0 0.0
    %269 = vmatprep.subr.mxu0 0.0
    %270 = vmatpush2.msra.mxu0 0.0
    %271 = vmatprep.subr.mxu0 0.0
    %272 = vmatpush2.msra.mxu0 0.0
    %273 = vmatprep.subr.mxu0 0.0
    %274 = vmatpush2.msra.mxu0 0.0
    %275 = vmatprep.subr.mxu0 0.0
    %276 = vmatpush2.msra.mxu0 0.0
    %277 = vmatprep.subr.mxu0 0.0
    %278 = vmatpush2.msra.mxu0 0.0
    %279 = vmatprep.subr.mxu0 0.0
    %280 = vmatpush2.msra.mxu0 0.0
    %281 = vmatprep.subr.mxu0 0.0
    %282 = vmatpush2.msra.mxu0 0.0
    %283 = vmatprep.subr.mxu0 0.0
    %284 = vmatpush2.msra.mxu0 0.0
    %285 = vmatprep.subr.mxu0 0.0
    %286 = vmatpush2.msra.mxu0 0.0
    %287 = vmatprep.subr.mxu0 0.0
    %288 = vmatpush2.msra.mxu0 0.0
    %289 = vmatprep.subr.mxu0 0.0
    %290 = vmatpush2.msra.mxu0 0.0
    %291 = vmatprep.subr.mxu0 0.0
    %292 = vmatpush2.msra.mxu0 0.0
    %293 = vmatprep.mubr.f32.mxu0 0.0
    %294 = vmatmul.mubr.f32.gmra.mxu0 %v207
    %v295 = vpop.f32.mrf.mxu0
    %v296 = vadd.f32 %v228, %v295
    %v297 = vpop.f32.mrf.mxu0
    %298 = vdwg.mxu0
    %v299 = vmax.f32 %v296, 0.0
    %v300 = vld [vmem:[#allocation2 + $0xd0] sm:$0xff]
    %v301 = vld [vmem:[#allocation2 + $0xd8] sm:$0xff]
    %v302 = vld [vmem:[#allocation2 + $0xe0] sm:$0xff]
    %v303 = vld [vmem:[#allocation2 + $0xe8] sm:$0xff]
    %v304 = vld [vmem:[#allocation2 + $0xf0] sm:$0xff]
    %v305 = vld [vmem:[#allocation2 + $0xf8] sm:$0xff]
    %v306 = vld [vmem:[#allocation2 + $0x100] sm:$0xff]
    %v307 = vld [vmem:[#allocation2 + $0x108] sm:$0xff]
    %v308 = vld [vmem:[#allocation2 + $0x110] sm:$0xff]
    %v309 = vld [vmem:[#allocation2 + $0x118] sm:$0xff]
    %v310 = vld [vmem:[#allocation2 + $0x120] sm:$0xff]
    %v311 = vld [vmem:[#allocation2 + $0x128] sm:$0xff]
    %v312 = vld [vmem:[#allocation2 + $0x130] sm:$0xff]
    %v313 = vld [vmem:[#allocation2 + $0x138] sm:$0xff]
    %v314 = vld [vmem:[#allocation2 + $0x140] sm:$0xff]
    %v315 = vld [vmem:[#allocation2 + $0x148] sm:$0xff]
    %316 = vmatprep.subr.mxu0 0.0
    %317 = vmatpush1.msra.mxu0 %v315
    %318 = vmatprep.subr.mxu0 0.0
    %319 = vmatpush1.msra.mxu0 %v314
    %320 = vmatprep.subr.mxu0 0.0
    %321 = vmatpush1.msra.mxu0 %v313
    %322 = vmatprep.subr.mxu0 0.0
    %323 = vmatpush1.msra.mxu0 %v312
    %324 = vmatprep.subr.mxu0 0.0
    %325 = vmatpush1.msra.mxu0 %v311
    %326 = vmatprep.subr.mxu0 0.0
    %327 = vmatpush1.msra.mxu0 %v310
    %328 = vmatprep.subr.mxu0 0.0
    %329 = vmatpush1.msra.mxu0 %v309
    %330 = vmatprep.subr.mxu0 0.0
    %331 = vmatpush1.msra.mxu0 %v308
    %332 = vmatprep.subr.mxu0 0.0
    %333 = vmatpush1.msra.mxu0 %v307
    %334 = vmatprep.subr.mxu0 0.0
    %335 = vmatpush1.msra.mxu0 %v306
    %336 = vmatprep.subr.mxu0 0.0
    %337 = vmatpush1.msra.mxu0 %v305
    %338 = vmatprep.subr.mxu0 0.0
    %339 = vmatpush1.msra.mxu0 %v304
    %340 = vmatprep.subr.mxu0 0.0
    %341 = vmatpush1.msra.mxu0 %v303
    %342 = vmatprep.subr.mxu0 0.0
    %343 = vmatpush1.msra.mxu0 %v302
    %344 = vmatprep.subr.mxu0 0.0
    %345 = vmatpush1.msra.mxu0 %v301
    %346 = vmatprep.subr.mxu0 0.0
    %347 = vmatpush1.msra.mxu0 %v300
    %348 = vmatprep.subr.mxu0 0.0
    %349 = vmatpush2.msra.mxu0 0.0
    %350 = vmatprep.subr.mxu0 0.0
    %351 = vmatpush2.msra.mxu0 0.0
    %352 = vmatprep.subr.mxu0 0.0
    %353 = vmatpush2.msra.mxu0 0.0
    %354 = vmatprep.subr.mxu0 0.0
    %355 = vmatpush2.msra.mxu0 0.0
    %356 = vmatprep.subr.mxu0 0.0
    %357 = vmatpush2.msra.mxu0 0.0
    %358 = vmatprep.subr.mxu0 0.0
    %359 = vmatpush2.msra.mxu0 0.0
    %360 = vmatprep.subr.mxu0 0.0
    %361 = vmatpush2.msra.mxu0 0.0
    %362 = vmatprep.subr.mxu0 0.0
    %363 = vmatpush2.msra.mxu0 0.0
    %364 = vmatprep.subr.mxu0 0.0
    %365 = vmatpush2.msra.mxu0 0.0
    %366 = vmatprep.subr.mxu0 0.0
    %367 = vmatpush2.msra.mxu0 0.0
    %368 = vmatprep.subr.mxu0 0.0
    %369 = vmatpush2.msra.mxu0 0.0
    %370 = vmatprep.subr.mxu0 0.0
    %371 = vmatpush2.msra.mxu0 0.0
    %372 = vmatprep.subr.mxu0 0.0
    %373 = vmatpush2.msra.mxu0 0.0
    %374 = vmatprep.subr.mxu0 0.0
    %375 = vmatpush2.msra.mxu0 0.0
    %376 = vmatprep.subr.mxu0 0.0
    %377 = vmatpush2.msra.mxu0 0.0
    %378 = vmatprep.subr.mxu0 0.0
    %379 = vmatpush2.msra.mxu0 0.0
    %380 = vmatprep.mubr.f32.mxu0 0.0
    %381 = vmatmul.mubr.f32.gmra.mxu0 %v114
    %v382 = vpop.f32.mrf.mxu0
    %v383 = vadd.f32 0.0, %v382
    %v384 = vpop.f32.mrf.mxu0
    %385 = vdwg.mxu0
    %v386 = vld [vmem:[#allocation2 + $0x1d8] sm:$0xff]
    %v387 = vld [vmem:[#allocation2 + $0x1e0] sm:$0xff]
    %v388 = vld [vmem:[#allocation2 + $0x1e8] sm:$0xff]
    %v389 = vld [vmem:[#allocation2 + $0x1f0] sm:$0xff]
    %v390 = vld [vmem:[#allocation2 + $0x1f8] sm:$0xff]
    %v391 = vld [vmem:[#allocation2 + $0x200] sm:$0xff]
    %v392 = vld [vmem:[#allocation2 + $0x208] sm:$0xff]
    %v393 = vld [vmem:[#allocation2 + $0x210] sm:$0xff]
    %v394 = vld [vmem:[#allocation2 + $0x218] sm:$0xff]
    %v395 = vld [vmem:[#allocation2 + $0x220] sm:$0xff]
    %v396 = vld [vmem:[#allocation2 + $0x228] sm:$0xff]
    %v397 = vld [vmem:[#allocation2 + $0x230] sm:$0xff]
    %v398 = vld [vmem:[#allocation2 + $0x238] sm:$0xff]
    %v399 = vld [vmem:[#allocation2 + $0x240] sm:$0xff]
    %v400 = vld [vmem:[#allocation2 + $0x248] sm:$0xff]
    %v401 = vld [vmem:[#allocation2 + $0x250] sm:$0xff]
    %v402 = vld [vmem:[#allocation2 + $0x258] sm:$0x1]
    %v403 = vlaneseq
    %v404 = vshrl.u32 %v403, 7
    %v405 = vsub.s32 0, %v404
    %v406 = vrot.slane %v402, %v405
    %407 = vmatprep.subr.mxu0 0.0
    %408 = vmatpush1.msra.mxu0 %v401
    %409 = vmatprep.subr.mxu0 0.0
    %410 = vmatpush1.msra.mxu0 %v400
    %411 = vmatprep.subr.mxu0 0.0
    %412 = vmatpush1.msra.mxu0 %v399
    %413 = vmatprep.subr.mxu0 0.0
    %414 = vmatpush1.msra.mxu0 %v398
    %415 = vmatprep.subr.mxu0 0.0
    %416 = vmatpush1.msra.mxu0 %v397
    %417 = vmatprep.subr.mxu0 0.0
    %418 = vmatpush1.msra.mxu0 %v396
    %419 = vmatprep.subr.mxu0 0.0
    %420 = vmatpush1.msra.mxu0 %v395
    %421 = vmatprep.subr.mxu0 0.0
    %422 = vmatpush1.msra.mxu0 %v394
    %423 = vmatprep.subr.mxu0 0.0
    %424 = vmatpush1.msra.mxu0 %v393
    %425 = vmatprep.subr.mxu0 0.0
    %426 = vmatpush1.msra.mxu0 %v392
    %427 = vmatprep.subr.mxu0 0.0
    %428 = vmatpush1.msra.mxu0 %v391
    %429 = vmatprep.subr.mxu0 0.0
    %430 = vmatpush1.msra.mxu0 %v390
    %431 = vmatprep.subr.mxu0 0.0
    %432 = vmatpush1.msra.mxu0 %v389
    %433 = vmatprep.subr.mxu0 0.0
    %434 = vmatpush1.msra.mxu0 %v388
    %435 = vmatprep.subr.mxu0 0.0
    %436 = vmatpush1.msra.mxu0 %v387
    %437 = vmatprep.subr.mxu0 0.0
    %438 = vmatpush1.msra.mxu0 %v386
    %439 = vmatprep.subr.mxu0 0.0
    %440 = vmatpush2.msra.mxu0 0.0
    %441 = vmatprep.subr.mxu0 0.0
    %442 = vmatpush2.msra.mxu0 0.0
    %443 = vmatprep.subr.mxu0 0.0
    %444 = vmatpush2.msra.mxu0 0.0
    %445 = vmatprep.subr.mxu0 0.0
    %446 = vmatpush2.msra.mxu0 0.0
    %447 = vmatprep.subr.mxu0 0.0
    %448 = vmatpush2.msra.mxu0 0.0
    %449 = vmatprep.subr.mxu0 0.0
    %450 = vmatpush2.msra.mxu0 0.0
    %451 = vmatprep.subr.mxu0 0.0
    %452 = vmatpush2.msra.mxu0 0.0
    %453 = vmatprep.subr.mxu0 0.0
    %454 = vmatpush2.msra.mxu0 0.0
    %455 = vmatprep.subr.mxu0 0.0
    %456 = vmatpush2.msra.mxu0 0.0
    %457 = vmatprep.subr.mxu0 0.0
    %458 = vmatpush2.msra.mxu0 0.0
    %459 = vmatprep.subr.mxu0 0.0
    %460 = vmatpush2.msra.mxu0 0.0
    %461 = vmatprep.subr.mxu0 0.0
    %462 = vmatpush2.msra.mxu0 0.0
    %463 = vmatprep.subr.mxu0 0.0
    %464 = vmatpush2.msra.mxu0 0.0
    %465 = vmatprep.subr.mxu0 0.0
    %466 = vmatpush2.msra.mxu0 0.0
    %467 = vmatprep.subr.mxu0 0.0
    %468 = vmatpush2.msra.mxu0 0.0
    %469 = vmatprep.subr.mxu0 0.0
    %470 = vmatpush2.msra.mxu0 0.0
    %471 = vmatprep.mubr.f32.mxu0 0.0
    %472 = vmatmul.mubr.f32.gmra.mxu0 %v299
    %v473 = vpop.f32.mrf.mxu0
    %v474 = vadd.f32 %v406, %v473
    %v475 = vpop.f32.mrf.mxu0
    %476 = vdwg.mxu0
    %vm477 = vcmp.gt.f32.partialorder %v474, 20.0
    %v478 = vmin.f32 %v474, 20.0
    %v479 = vmul.f32 %v478, 1.442695
    %v480 = vpow.pop %v479
    %v481 = vadd.f32 %v480, 1.0
    %v482 = vlog2.pop %v481
    %v483 = vmul.f32 %v482, 0.6931472
    %v484 = vmul.f32 -0.5, %v480
    %v485 = vadd.f32 %v484, 1.0
    %v486 = vmul.f32 %v485, %v480
    %v487 = vand.u32 2147483647, %v480
    %vm488 = vcmp.lt.f32.partialorder %v487, 0.0004427343
    %v489 = vsel %vm488, %v486, %v483
    %v490 = vsel %vm477, %v474, %v489
    %v491 = vmax.f32 %v490, 0.006737947
    %v492 = vmin.f32 %v491, 7.389056
    %v493 = vlaneseq
    %v494 = vand.u32 %v493, 127
    %vm495 = vcmp.lt.s32.totalorder %v494, 16
    %vm496 = vcmp.lt.s32.totalorder %v494, 20
    %v497 = vsel %vm496, %v474, %v492
    %v498 = vsel %vm495, %v383, %v497
    %499 = vst [vmem:[#allocation5 + $0x4] sm:$0xf] %v498
    // Predicated region
    $region14: #{two_stage_gauss_policy_forward.1} parent=1 // pred_check
      _
    $region15: #{two_stage_gauss_policy_forward.1} parent=1 // pred_check_branch
      %501 = sbr.rel (0) target = $region17
    $region16: #{two_stage_gauss_policy_forward.1} parent=1 // pred_region
      %s503 = ssub.s32 128, 128
      %504 = vsyncadd [#allocation4], %s503
      %s506 = sshll.u32 [#allocation5], 4
      %s507 = int_to_ptr.vmem [resolvable:$true] %s506
      %509 = dma.vmem_to_hbm [thread:$0]  %s507, 128, %s2, [#allocation4]
    $region17: #{two_stage_gauss_policy_forward.1} parent=1 // pred_fallthru
      _
    // Predicated region
    $region18: #{two_stage_gauss_policy_forward.1} parent=1 // pred_check
      _
    $region19: #{two_stage_gauss_policy_forward.1} parent=1 // pred_check_branch
      %511 = sbr.rel (0) target = $region21
    $region20: #{two_stage_gauss_policy_forward.1} parent=1 // pred_region
      %512 = dma.done [#allocation4], 128
    $region21: #{two_stage_gauss_policy_forward.1} parent=1 // pred_fallthru
      _
    %513 = vsyncpa [#allocation3], 1
    %514 = vsyncpa [#allocation4], 1

</llo_original>
